<compile_context>
chip_gen: v7x
topology: tpu7x:2x2x1
jax: 0.10.0
libtpu: 0.0.40
codegen_flags: <defaults>
</compile_context>

<pallas_src>
import math

import jax
import jax.numpy as jnp
from jax.experimental import pallas as pl
from jax.experimental.pallas import tpu as pltpu

# ----- ArcFace constants (match the PyTorch module defaults) -----------------
M = 0.5
S = 64.0
COS_M = math.cos(M)
SIN_M = math.sin(M)
TH = math.cos(math.pi - M)          # cos(pi - m)
MM = math.sin(math.pi - M) * M      # sin(pi - m) * m
EPS = 1e-12                         # F.normalize eps


def _round_up(x, m):
    return ((x + m - 1) // m) * m


def _arc_margin_kernel(x_ref, w_ref, label_ref, out_ref):
    """One class tile: out[:, j*TC:(j+1)*TC] = arcface(x, W[j*TC:(j+1)*TC])."""
    j = pl.program_id(0)
    tc = out_ref.shape[1]                        # class-tile width (static)

    x = x_ref[...]                               # (B, D)   f32
    w = w_ref[...]                               # (TC, D)  f32
    label = label_ref[...]                       # (B, 1)   int32

    # Row-wise L2 normalization: rsqrt (EUP slot) + multiply (VPU) instead of
    # sqrt + divide.  x_n is recomputed per tile: it is only (B, D) work and
    # recompute stays correct when the class axis is split across TensorCores
    # ("parallel"), unlike a pl.when(program_id == 0) scratch hoist.
    x_inv = jax.lax.rsqrt(
        jnp.maximum(jnp.sum(x * x, axis=-1, keepdims=True), EPS * EPS))
    x_n = x * x_inv
    w_inv = jax.lax.rsqrt(
        jnp.maximum(jnp.sum(w * w, axis=-1, keepdims=True), EPS * EPS))
    w_n = w * w_inv

    # cosine = x_n @ w_n^T via a transposed-RHS contraction: the MXU consumes
    # this natively, no XLU transpose / extra VMEM copy of the (TC, D) tile.
    # (Casting x_n/w_n to bf16 here is a throughput option on v6e/v7x; kept
    #  f32 for exact parity with the PyTorch module.)
    cosine = jax.lax.dot_general(
        x_n, w_n,
        dimension_numbers=(((1,), (1,)), ((), ())),
        preferred_element_type=jnp.float32)      # (B, TC)

    # phi = cos(theta + m); clamp 1 - cos^2 at 0 so rounding past |cos|=1
    # cannot produce NaN.
    sine = jnp.sqrt(jnp.maximum(1.0 - cosine * cosine, 0.0))
    phi = cosine * COS_M - sine * SIN_M
    phi = jnp.where(cosine > TH, phi, cosine - MM)   # easy_margin = False

    # One-hot select as a single where on globally-offset class ids.
    b = cosine.shape[0]
    class_ids = j * tc + jax.lax.broadcasted_iota(jnp.int32, (b, tc), 1)
    out = jnp.where(class_ids == label, phi, cosine) * S
    out_ref[...] = out.astype(out_ref.dtype)


def arc_margin_forward(x, weight, label, *, class_tile=2048):
    """x: (B, D) f32, weight: (C, D) f32, label: (B,) int -> (B, C) f32."""
    B, D = x.shape
    C, D2 = weight.shape
    assert D == D2
    assert class_tile % 128 == 0

    # Pad batch to the f32 sublane (8) and classes to a lane-dense multiple
    # of 128 / of the class tile so output stores are unmasked and the grid
    # divides exactly.  Zero-padded W rows normalize to 0 and are sliced off.
    b_pad = _round_up(B, 8)
    c_pad = _round_up(C, 128)
    tc = min(class_tile, c_pad)
    c_pad = _round_up(c_pad, tc)
    num_tiles = c_pad // tc

    x_p = x if b_pad == B else jnp.pad(x, ((0, b_pad - B), (0, 0)))
    w_p = weight if c_pad == C else jnp.pad(weight, ((0, c_pad - C), (0, 0)))
    label2d = jnp.pad(label.astype(jnp.int32).reshape(B, 1),
                      ((0, b_pad - B), (0, 0)), constant_values=-1)

    cost = pl.CostEstimate(
        flops=(2 * b_pad * c_pad * D              # cosine matmul
               + 3 * (b_pad + c_pad) * D          # normalization
               + 8 * b_pad * c_pad),              # margin elementwise chain
        transcendentals=b_pad * c_pad + b_pad + c_pad,   # sqrt / rsqrt
        bytes_accessed=4 * (b_pad * D + c_pad * D + b_pad * c_pad + b_pad),
    )

    out = pl.pallas_call(
        _arc_margin_kernel,
        out_shape=jax.ShapeDtypeStruct((b_pad, c_pad), jnp.float32),
        grid_spec=pltpu.PrefetchScalarGridSpec(
            num_scalar_prefetch=0,
            grid=(num_tiles,),
            in_specs=[
                pl.BlockSpec((b_pad, D), lambda j: (0, 0)),   # x (resident)
                pl.BlockSpec((tc, D), lambda j: (j, 0)),      # W tile (pipelined)
                pl.BlockSpec((b_pad, 1), lambda j: (0, 0)),   # labels (resident)
            ],
            out_specs=pl.BlockSpec((b_pad, tc), lambda j: (0, j)),
        ),
        compiler_params=pltpu.CompilerParams(
            # Class tiles are independent -> shard across v7x's 2 TensorCores;
            # harmless on single-TC v5e/v6e.
            dimension_semantics=("parallel",),
            # Explicit VMEM budget; with tc<=2048, D=256, f32 the double-
            # buffered W tile is ~4 MiB, well under v7x's 32 MiB scoped limit.
            vmem_limit_bytes=32 * 1024 * 1024,
        ),
        cost_estimate=cost,
    )(x_p, w_p, label2d)

    return out[:B, :C]


def init_arc_margin_weight(key, num_class=2, feat_dim=256):
    # nn.init.xavier_uniform_ on a (num_class, feat_dim) tensor.
    bound = math.sqrt(6.0 / (feat_dim + num_class))
    return jax.random.uniform(key, (num_class, feat_dim), dtype=jnp.float32,
                              minval=-bound, maxval=bound)


def _reference(x, w, label):
    xn = x / jnp.maximum(jnp.linalg.norm(x, axis=-1, keepdims=True), EPS)
    wn = w / jnp.maximum(jnp.linalg.norm(w, axis=-1, keepdims=True), EPS)
    cos = xn @ wn.T
    sin = jnp.sqrt(jnp.maximum(1.0 - cos * cos, 0.0))
    phi = cos * COS_M - sin * SIN_M
    phi = jnp.where(cos > TH, phi, cos - MM)
    oh = jax.nn.one_hot(label, w.shape[0], dtype=jnp.float32)
    return (oh * phi + (1.0 - oh) * cos) * S


if __name__ == "__main__":
    key = jax.random.PRNGKey(0)

    # Case 1: shapes implied by the PyTorch module (numClass=2, 256-d feats).
    k_w, k_x, k_l, key = jax.random.split(key, 4)
    num_class, feat_dim, batch = 2, 256, 8
    weight = init_arc_margin_weight(k_w, num_class, feat_dim)
    x = jax.random.normal(k_x, (batch, feat_dim), dtype=jnp.float32)
    label = jax.random.randint(k_l, (batch,), 0, num_class, dtype=jnp.int32)

    out = arc_margin_forward(x, weight, label)
    jax.block_until_ready(out)
    assert out.shape == (batch, num_class)
    assert jnp.allclose(out, _reference(x, weight, label),
                        atol=1e-4, rtol=1e-4), "case 1 mismatch vs reference"

    # Case 2: exercises class-dim padding + a multi-tile grid (3 tiles of 128).
    k_w, k_x, k_l, key = jax.random.split(key, 4)
    num_class2, batch2 = 300, 8
    weight2 = init_arc_margin_weight(k_w, num_class2, feat_dim)
    x2 = jax.random.normal(k_x, (batch2, feat_dim), dtype=jnp.float32)
    label2 = jax.random.randint(k_l, (batch2,), 0, num_class2, dtype=jnp.int32)

    out2 = arc_margin_forward(x2, weight2, label2, class_tile=128)
    jax.block_until_ready(out2)
    assert out2.shape == (batch2, num_class2)
    assert jnp.allclose(out2, _reference(x2, weight2, label2),
                        atol=1e-4, rtol=1e-4), "case 2 mismatch vs reference"

    print("KERNEL_OK")
</pallas_src>

<mosaic_0001>
module attributes {stable_mosaic.version = 11 : i64} {
  func.func @_arc_margin_kernel(%arg0: i32, %arg1: memref<8x256xf32, #tpu.memory_space<vmem>>, %arg2: memref<128x256xf32, #tpu.memory_space<vmem>>, %arg3: memref<8x1xi32, #tpu.memory_space<vmem>>, %arg4: memref<8x128xf32, #tpu.memory_space<vmem>>) attributes {dimension_semantics = [#tpu.dimension_semantics<parallel>], iteration_bounds = array<i64: 1>, scalar_prefetch = 0 : i64, scratch_operands = 0 : i64, tpu.core_type = #tpu.core_type<tc>, window_params = [{pipeline_mode = #tpu.pipeline_mode<synchronous>, transform_indices = @transform_0, window_bounds = array<i64: 8, 256>}, {transform_indices = @transform_1, window_bounds = array<i64: 128, 256>}, {pipeline_mode = #tpu.pipeline_mode<synchronous>, transform_indices = @transform_2, window_bounds = array<i64: 8, 1>}, {transform_indices = @transform_3, window_bounds = array<i64: 8, 128>}]} {
    %c0 = arith.constant 0 : index
    %c0_0 = arith.constant 0 : index
    %0 = vector.load %arg1[%c0, %c0_0] : memref<8x256xf32, #tpu.memory_space<vmem>>, vector<8x256xf32>
    %c0_1 = arith.constant 0 : index
    %c0_2 = arith.constant 0 : index
    %1 = vector.load %arg2[%c0_1, %c0_2] : memref<128x256xf32, #tpu.memory_space<vmem>>, vector<128x256xf32>
    %c0_3 = arith.constant 0 : index
    %c0_4 = arith.constant 0 : index
    %2 = vector.load %arg3[%c0_3, %c0_4] : memref<8x1xi32, #tpu.memory_space<vmem>>, vector<8x1xi32>
    %3 = arith.mulf %0, %0 : vector<8x256xf32>
    %cst = arith.constant dense<0.000000e+00> : vector<8xf32>
    %4 = vector.multi_reduction <add>, %3, %cst [1] : vector<8x256xf32> to vector<8xf32>
    %5 = vector.shape_cast %4 : vector<8xf32> to vector<8x1xf32>
    %cst_5 = arith.constant 1.000000e-24 : f32
    %6 = vector.broadcast %cst_5 : f32 to vector<8x1xf32>
    %7 = arith.maximumf %5, %6 : vector<8x1xf32>
    %8 = math.rsqrt %7 : vector<8x1xf32>
    %9 = vector.broadcast %8 : vector<8x1xf32> to vector<8x256xf32>
    %10 = arith.mulf %0, %9 : vector<8x256xf32>
    %11 = arith.mulf %1, %1 : vector<128x256xf32>
    %cst_6 = arith.constant dense<0.000000e+00> : vector<128xf32>
    %12 = vector.multi_reduction <add>, %11, %cst_6 [1] : vector<128x256xf32> to vector<128xf32>
    %13 = vector.shape_cast %12 : vector<128xf32> to vector<128x1xf32>
    %cst_7 = arith.constant 1.000000e-24 : f32
    %14 = vector.broadcast %cst_7 : f32 to vector<128x1xf32>
    %15 = arith.maximumf %13, %14 : vector<128x1xf32>
    %16 = math.rsqrt %15 : vector<128x1xf32>
    %17 = vector.broadcast %16 : vector<128x1xf32> to vector<128x256xf32>
    %18 = arith.mulf %1, %17 : vector<128x256xf32>
    %cst_8 = arith.constant dense<0.000000e+00> : vector<8x128xf32>
    %19 = tpu.matmul %10, %18, %cst_8 {dimension_numbers = #tpu.dot_dimension_numbers<[1], [1], [0], [0], [0, 0, 1, 0], [], []>} : vector<8x256xf32>, vector<128x256xf32>, vector<8x128xf32> -> vector<8x128xf32>
    %20 = arith.mulf %19, %19 : vector<8x128xf32>
    %cst_9 = arith.constant 1.000000e+00 : f32
    %21 = vector.broadcast %cst_9 : f32 to vector<8x128xf32>
    %22 = arith.subf %21, %20 : vector<8x128xf32>
    %cst_10 = arith.constant 0.000000e+00 : f32
    %23 = vector.broadcast %cst_10 : f32 to vector<8x128xf32>
    %24 = arith.maximumf %22, %23 : vector<8x128xf32>
    %25 = math.sqrt %24 : vector<8x128xf32>
    %cst_11 = arith.constant 0.87758255 : f32
    %26 = vector.broadcast %cst_11 : f32 to vector<8x128xf32>
    %27 = arith.mulf %19, %26 : vector<8x128xf32>
    %cst_12 = arith.constant 0.47942555 : f32
    %28 = vector.broadcast %cst_12 : f32 to vector<8x128xf32>
    %29 = arith.mulf %25, %28 : vector<8x128xf32>
    %30 = arith.subf %27, %29 : vector<8x128xf32>
    %cst_13 = arith.constant -0.87758255 : f32
    %31 = vector.broadcast %cst_13 : f32 to vector<8x128xf32>
    %32 = arith.cmpf ogt, %19, %31 : vector<8x128xf32>
    %cst_14 = arith.constant 0.239712775 : f32
    %33 = vector.broadcast %cst_14 : f32 to vector<8x128xf32>
    %34 = arith.subf %19, %33 : vector<8x128xf32>
    %35 = arith.select %32, %30, %34 : vector<8x128xi1>, vector<8x128xf32>
    %c128_i32 = arith.constant 128 : i32
    %36 = arith.muli %arg0, %c128_i32 : i32
    %37 = tpu.iota {dimensions = array<i32: 1>} : vector<8x128xi32>
    %38 = vector.broadcast %36 : i32 to vector<8x128xi32>
    %39 = arith.addi %38, %37 : vector<8x128xi32>
    %40 = vector.broadcast %2 : vector<8x1xi32> to vector<8x128xi32>
    %41 = arith.cmpi eq, %39, %40 : vector<8x128xi32>
    %42 = arith.select %41, %35, %19 : vector<8x128xi1>, vector<8x128xf32>
    %cst_15 = arith.constant 6.400000e+01 : f32
    %43 = vector.broadcast %cst_15 : f32 to vector<8x128xf32>
    %44 = arith.mulf %42, %43 : vector<8x128xf32>
    %c0_16 = arith.constant 0 : index
    %c0_17 = arith.constant 0 : index
    %45 = vector.load %arg4[%c0_16, %c0_17] : memref<8x128xf32, #tpu.memory_space<vmem>>, vector<8x128xf32>
    tpu.vector_store %arg4[%c0_16, %c0_17], %44 {strides = array<i32>} : memref<8x128xf32, #tpu.memory_space<vmem>>, vector<8x128xf32>,
    return
  }
  func.func @transform_0(%arg0: i32) -> (i32, i32) {
    %c0_i32 = arith.constant 0 : i32
    %c0_i32_0 = arith.constant 0 : i32
    %c0_i32_1 = arith.constant 0 : i32
    return %c0_i32, %c0_i32_0 : i32, i32
  }
  func.func @transform_1(%arg0: i32) -> (i32, i32) {
    %c0_i32 = arith.constant 0 : i32
    %c0_i32_0 = arith.constant 0 : i32
    return %arg0, %c0_i32 : i32, i32
  }
  func.func @transform_2(%arg0: i32) -> (i32, i32) {
    %c0_i32 = arith.constant 0 : i32
    %c0_i32_0 = arith.constant 0 : i32
    %c0_i32_1 = arith.constant 0 : i32
    return %c0_i32, %c0_i32_0 : i32, i32
  }
  func.func @transform_3(%arg0: i32) -> (i32, i32) {
    %c0_i32 = arith.constant 0 : i32
    %c0_i32_0 = arith.constant 0 : i32
    return %c0_i32, %arg0 : i32, i32
  }
}

</mosaic_0001>

<llo_original>
// kernel: tpu_custom_call.1
$region0: #{tpu_custom_call.1}
  #allocation0 [shape = 'u32[]', space=smem, size = 0x4, offset = 0x4, fixed_abs, tag = 'smem constant byte address 0x4 - core index']
  #allocation1 [shape = 'u32[144,128]{1,0:T(1,128)}', space=vmem, size = 0x12000, scoped, tag = 'internal scratch']
  %s0 = inlined_call_operand.hbm [shape: f32[8,256], index: 0, kind: input, shape index: {}]
  %s1 = inlined_call_operand.hbm [shape: f32[128,256], index: 1, kind: input, shape index: {}]
  %s2 = inlined_call_operand.vmem [shape: s32[8,1], index: 2, kind: input, shape index: {}]
  %s3 = inlined_call_operand.hbm [shape: f32[8,128], index: 3, kind: output, shape index: {}]
  %s4 = sld [smem:[#allocation0]]
  $region30: #{tpu_custom_call.1} parent=0
    _
  %s6 = ssub.s32 1, %s4
  %s7 = scalar_select 0, %s6, %s4
  $region1: #{tpu_custom_call.1} parent=0
    #allocation2 [shape = 'u8[8192]{0}', space=vmem, size = 0x2000, scoped, tag = 'input window, operand 0, single buffered']
    #allocation3 [shape = 's32[1]{0}', space=sflag, size = 0x4, scoped, tag = 'scoped memory for tpu_custom_call.1']
    #allocation4 [shape = 's32[1]{0}', space=sflag, size = 0x4, scoped, tag = 'scoped memory for tpu_custom_call.1']
    #allocation5 [shape = 'u8[131072]{0}', space=vmem, size = 0x20000, scoped, tag = 'input window, operand 1, single buffered']
    #allocation6 [shape = 's32[1]{0}', space=sflag, size = 0x4, scoped, tag = 'scoped memory for tpu_custom_call.1']
    #allocation7 [shape = 'u8[4096]{0}', space=vmem, size = 0x1000, scoped, tag = 'output window, operand 0, single buffered']
    %8 = vsyncpa [#allocation3], 0
    %9 = vsyncpa [#allocation6], 0
    %10 = vsyncpa [#allocation4], 0
    // Predicated region
    $region2: #{tpu_custom_call.1} parent=1 // pred_check
      _
    $region3: #{tpu_custom_call.1} parent=1 // pred_check_branch
      %12 = sbr.rel (0) target = $region5
    $region4: #{tpu_custom_call.1} parent=1 // pred_region
      %s14 = ssub.s32 256, 256
      %15 = vsyncadd [#allocation3], %s14
      %s17 = sshll.u32 [#allocation2], 4
      %s18 = int_to_ptr.vmem [resolvable:$true] %s17
      %20 = dma.hbm_to_vmem [thread:$0]  %s0, 256, %s18, [#allocation3]
    $region5: #{tpu_custom_call.1} parent=1 // pred_fallthru
      _
    // Predicated region
    $region6: #{tpu_custom_call.1} parent=1 // pred_check
      _
    $region7: #{tpu_custom_call.1} parent=1 // pred_check_branch
      %22 = sbr.rel (0) target = $region9
    $region8: #{tpu_custom_call.1} parent=1 // pred_region
      %s24 = ssub.s32 4096, 4096
      %25 = vsyncadd [#allocation6], %s24
      %s26 = sshll.u32 [#allocation5], 4
      %s27 = int_to_ptr.vmem [resolvable:$true] %s26
      %32 = dma.hbm_to_vmem [thread:$0]  %s1, 4096, %s27, [#allocation6], 256, 256, 16
    $region9: #{tpu_custom_call.1} parent=1 // pred_fallthru
      _
    // Predicated region
    $region10: #{tpu_custom_call.1} parent=1 // pred_check
      _
    $region11: #{tpu_custom_call.1} parent=1 // pred_check_branch
      %34 = sbr.rel (0) target = $region13
    $region12: #{tpu_custom_call.1} parent=1 // pred_region
      _
    $region13: #{tpu_custom_call.1} parent=1 // pred_fallthru
      _
    // Predicated region
    $region14: #{tpu_custom_call.1} parent=1 // pred_check
      _
    $region15: #{tpu_custom_call.1} parent=1 // pred_check_branch
      %36 = sbr.rel (0) target = $region17
    $region16: #{tpu_custom_call.1} parent=1 // pred_region
      %37 = dma.done [#allocation3], 256
    $region17: #{tpu_custom_call.1} parent=1 // pred_fallthru
      _
    // Predicated region
    $region18: #{tpu_custom_call.1} parent=1 // pred_check
      _
    $region19: #{tpu_custom_call.1} parent=1 // pred_check_branch
      %39 = sbr.rel (0) target = $region21
    $region20: #{tpu_custom_call.1} parent=1 // pred_region
      %40 = dma.done [#allocation6], 4096
    $region21: #{tpu_custom_call.1} parent=1 // pred_fallthru
      _
    %v41 = vld [vmem:[#allocation2] sm:$0xff]
    %v42 = vld [vmem:[#allocation2 + $0x8] sm:$0xff]
    %v43 = vld [vmem:[#allocation5] sm:$0xff]
    %v44 = vld [vmem:[#allocation5 + $0x8] sm:$0xff]
    %v45 = vld [vmem:[#allocation5 + $0x10] sm:$0xff]
    %v46 = vld [vmem:[#allocation5 + $0x18] sm:$0xff]
    %v47 = vld [vmem:[#allocation5 + $0x20] sm:$0xff]
    %v48 = vld [vmem:[#allocation5 + $0x28] sm:$0xff]
    %v49 = vld [vmem:[#allocation5 + $0x30] sm:$0xff]
    %v50 = vld [vmem:[#allocation5 + $0x38] sm:$0xff]
    %v51 = vld [vmem:[#allocation5 + $0x40] sm:$0xff]
    %v52 = vld [vmem:[#allocation5 + $0x48] sm:$0xff]
    %v53 = vld [vmem:[#allocation5 + $0x50] sm:$0xff]
    %v54 = vld [vmem:[#allocation5 + $0x58] sm:$0xff]
    %v55 = vld [vmem:[#allocation5 + $0x60] sm:$0xff]
    %v56 = vld [vmem:[#allocation5 + $0x68] sm:$0xff]
    %v57 = vld [vmem:[#allocation5 + $0x70] sm:$0xff]
    %v58 = vld [vmem:[#allocation5 + $0x78] sm:$0xff]
    %v59 = vld [vmem:[#allocation5 + $0x80] sm:$0xff]
    %v60 = vld [vmem:[#allocation5 + $0x88] sm:$0xff]
    %v61 = vld [vmem:[#allocation5 + $0x90] sm:$0xff]
    %v62 = vld [vmem:[#allocation5 + $0x98] sm:$0xff]
    %v63 = vld [vmem:[#allocation5 + $0xa0] sm:$0xff]
    %v64 = vld [vmem:[#allocation5 + $0xa8] sm:$0xff]
    %v65 = vld [vmem:[#allocation5 + $0xb0] sm:$0xff]
    %v66 = vld [vmem:[#allocation5 + $0xb8] sm:$0xff]
    %v67 = vld [vmem:[#allocation5 + $0xc0] sm:$0xff]
    %v68 = vld [vmem:[#allocation5 + $0xc8] sm:$0xff]
    %v69 = vld [vmem:[#allocation5 + $0xd0] sm:$0xff]
    %v70 = vld [vmem:[#allocation5 + $0xd8] sm:$0xff]
    %v71 = vld [vmem:[#allocation5 + $0xe0] sm:$0xff]
    %v72 = vld [vmem:[#allocation5 + $0xe8] sm:$0xff]
    %v73 = vld [vmem:[#allocation5 + $0xf0] sm:$0xff]
    %v74 = vld [vmem:[#allocation5 + $0xf8] sm:$0xff]
    %v75 = vld [vmem:[%s2] sm:$0xff]
    %v76 = vmul.f32 %v41, %v41
    %v77 = vmul.f32 %v42, %v42
    %v78 = vadd.f32 %v76, %v77
    %79 = vadd.xlane.f32.xlu0 %v78
    %v80 = vpop.xlane.xlu0 %79
    %v81 = vmax.f32 %v80, 1e-24
    %v82 = vrsqrt.pop %v81
    %v83 = vmul.f32 %v41, %v82
    %v84 = vmul.f32 %v42, %v82
    %v85 = vmul.f32 %v43, %v43
    %v86 = vmul.f32 %v44, %v44
    %v87 = vmul.f32 %v45, %v45
    %v88 = vmul.f32 %v46, %v46
    %v89 = vmul.f32 %v47, %v47
    %v90 = vmul.f32 %v48, %v48
    %v91 = vmul.f32 %v49, %v49
    %v92 = vmul.f32 %v50, %v50
    %v93 = vmul.f32 %v51, %v51
    %v94 = vmul.f32 %v52, %v52
    %v95 = vmul.f32 %v53, %v53
    %v96 = vmul.f32 %v54, %v54
    %v97 = vmul.f32 %v55, %v55
    %v98 = vmul.f32 %v56, %v56
    %v99 = vmul.f32 %v57, %v57
    %v100 = vmul.f32 %v58, %v58
    %v101 = vmul.f32 %v59, %v59
    %v102 = vmul.f32 %v60, %v60
    %v103 = vmul.f32 %v61, %v61
    %v104 = vmul.f32 %v62, %v62
    %v105 = vmul.f32 %v63, %v63
    %v106 = vmul.f32 %v64, %v64
    %v107 = vmul.f32 %v65, %v65
    %v108 = vmul.f32 %v66, %v66
    %v109 = vmul.f32 %v67, %v67
    %v110 = vmul.f32 %v68, %v68
    %v111 = vmul.f32 %v69, %v69
    %v112 = vmul.f32 %v70, %v70
    %v113 = vmul.f32 %v71, %v71
    %v114 = vmul.f32 %v72, %v72
    %v115 = vmul.f32 %v73, %v73
    %v116 = vmul.f32 %v74, %v74
    %v117 = vadd.f32 %v85, %v86
    %118 = vadd.xlane.f32.xlu0 %v117
    %v119 = vpop.xlane.xlu0 %118
    %v120 = vadd.f32 %v87, %v88
    %121 = vadd.xlane.f32.xlu0 %v120
    %v122 = vpop.xlane.xlu0 %121
    %v123 = vadd.f32 %v89, %v90
    %124 = vadd.xlane.f32.xlu0 %v123
    %v125 = vpop.xlane.xlu0 %124
    %v126 = vadd.f32 %v91, %v92
    %127 = vadd.xlane.f32.xlu0 %v126
    %v128 = vpop.xlane.xlu0 %127
    %v129 = vadd.f32 %v93, %v94
    %130 = vadd.xlane.f32.xlu0 %v129
    %v131 = vpop.xlane.xlu0 %130
    %v132 = vadd.f32 %v95, %v96
    %133 = vadd.xlane.f32.xlu0 %v132
    %v134 = vpop.xlane.xlu0 %133
    %v135 = vadd.f32 %v97, %v98
    %136 = vadd.xlane.f32.xlu0 %v135
    %v137 = vpop.xlane.xlu0 %136
    %v138 = vadd.f32 %v99, %v100
    %139 = vadd.xlane.f32.xlu0 %v138
    %v140 = vpop.xlane.xlu0 %139
    %v141 = vadd.f32 %v101, %v102
    %142 = vadd.xlane.f32.xlu0 %v141
    %v143 = vpop.xlane.xlu0 %142
    %v144 = vadd.f32 %v103, %v104
    %145 = vadd.xlane.f32.xlu0 %v144
    %v146 = vpop.xlane.xlu0 %145
    %v147 = vadd.f32 %v105, %v106
    %148 = vadd.xlane.f32.xlu0 %v147
    %v149 = vpop.xlane.xlu0 %148
    %v150 = vadd.f32 %v107, %v108
    %151 = vadd.xlane.f32.xlu0 %v150
    %v152 = vpop.xlane.xlu0 %151
    %v153 = vadd.f32 %v109, %v110
    %154 = vadd.xlane.f32.xlu0 %v153
    %v155 = vpop.xlane.xlu0 %154
    %v156 = vadd.f32 %v111, %v112
    %157 = vadd.xlane.f32.xlu0 %v156
    %v158 = vpop.xlane.xlu0 %157
    %v159 = vadd.f32 %v113, %v114
    %160 = vadd.xlane.f32.xlu0 %v159
    %v161 = vpop.xlane.xlu0 %160
    %v162 = vadd.f32 %v115, %v116
    %163 = vadd.xlane.f32.xlu0 %v162
    %v164 = vpop.xlane.xlu0 %163
    %v165 = vmax.f32 %v119, 1e-24
    %v166 = vmax.f32 %v122, 1e-24
    %v167 = vmax.f32 %v125, 1e-24
    %v168 = vmax.f32 %v128, 1e-24
    %v169 = vmax.f32 %v131, 1e-24
    %v170 = vmax.f32 %v134, 1e-24
    %v171 = vmax.f32 %v137, 1e-24
    %v172 = vmax.f32 %v140, 1e-24
    %v173 = vmax.f32 %v143, 1e-24
    %v174 = vmax.f32 %v146, 1e-24
    %v175 = vmax.f32 %v149, 1e-24
    %v176 = vmax.f32 %v152, 1e-24
    %v177 = vmax.f32 %v155, 1e-24
    %v178 = vmax.f32 %v158, 1e-24
    %v179 = vmax.f32 %v161, 1e-24
    %v180 = vmax.f32 %v164, 1e-24
    %v181 = vrsqrt.pop %v165
    %v182 = vrsqrt.pop %v166
    %v183 = vrsqrt.pop %v167
    %v184 = vrsqrt.pop %v168
    %v185 = vrsqrt.pop %v169
    %v186 = vrsqrt.pop %v170
    %v187 = vrsqrt.pop %v171
    %v188 = vrsqrt.pop %v172
    %v189 = vrsqrt.pop %v173
    %v190 = vrsqrt.pop %v174
    %v191 = vrsqrt.pop %v175
    %v192 = vrsqrt.pop %v176
    %v193 = vrsqrt.pop %v177
    %v194 = vrsqrt.pop %v178
    %v195 = vrsqrt.pop %v179
    %v196 = vrsqrt.pop %v180
    %v197 = vmul.f32 %v43, %v181
    %v198 = vmul.f32 %v44, %v181
    %v199 = vmul.f32 %v45, %v182
    %v200 = vmul.f32 %v46, %v182
    %v201 = vmul.f32 %v47, %v183
    %v202 = vmul.f32 %v48, %v183
    %v203 = vmul.f32 %v49, %v184
    %v204 = vmul.f32 %v50, %v184
    %v205 = vmul.f32 %v51, %v185
    %v206 = vmul.f32 %v52, %v185
    %v207 = vmul.f32 %v53, %v186
    %v208 = vmul.f32 %v54, %v186
    %v209 = vmul.f32 %v55, %v187
    %v210 = vmul.f32 %v56, %v187
    %v211 = vmul.f32 %v57, %v188
    %v212 = vmul.f32 %v58, %v188
    %v213 = vmul.f32 %v59, %v189
    %v214 = vmul.f32 %v60, %v189
    %v215 = vmul.f32 %v61, %v190
    %v216 = vmul.f32 %v62, %v190
    %v217 = vmul.f32 %v63, %v191
    %v218 = vmul.f32 %v64, %v191
    %v219 = vmul.f32 %v65, %v192
    %v220 = vmul.f32 %v66, %v192
    %v221 = vmul.f32 %v67, %v193
    %v222 = vmul.f32 %v68, %v193
    %v223 = vmul.f32 %v69, %v194
    %v224 = vmul.f32 %v70, %v194
    %v225 = vmul.f32 %v71, %v195
    %v226 = vmul.f32 %v72, %v195
    %v227 = vmul.f32 %v73, %v196
    %v228 = vmul.f32 %v74, %v196
    %229 = vmatprep.subr.mxu0 %v198
    %230 = vmatpush1.xpose.msra.mxu0 %v197
    %231 = vmatprep.subr.mxu0 %v200
    %232 = vmatpush1.xpose.msra.mxu0 %v199
    %233 = vmatprep.subr.mxu0 %v202
    %234 = vmatpush1.xpose.msra.mxu0 %v201
    %235 = vmatprep.subr.mxu0 %v204
    %236 = vmatpush1.xpose.msra.mxu0 %v203
    %237 = vmatprep.subr.mxu0 %v206
    %238 = vmatpush1.xpose.msra.mxu0 %v205
    %239 = vmatprep.subr.mxu0 %v208
    %240 = vmatpush1.xpose.msra.mxu0 %v207
    %241 = vmatprep.subr.mxu0 %v210
    %242 = vmatpush1.xpose.msra.mxu0 %v209
    %243 = vmatprep.subr.mxu0 %v212
    %244 = vmatpush1.xpose.msra.mxu0 %v211
    %245 = vmatprep.subr.mxu0 %v214
    %246 = vmatpush1.xpose.msra.mxu0 %v213
    %247 = vmatprep.subr.mxu0 %v216
    %248 = vmatpush1.xpose.msra.mxu0 %v215
    %249 = vmatprep.subr.mxu0 %v218
    %250 = vmatpush1.xpose.msra.mxu0 %v217
    %251 = vmatprep.subr.mxu0 %v220
    %252 = vmatpush1.xpose.msra.mxu0 %v219
    %253 = vmatprep.subr.mxu0 %v222
    %254 = vmatpush1.xpose.msra.mxu0 %v221
    %255 = vmatprep.subr.mxu0 %v224
    %256 = vmatpush1.xpose.msra.mxu0 %v223
    %257 = vmatprep.subr.mxu0 %v226
    %258 = vmatpush1.xpose.msra.mxu0 %v225
    %259 = vmatprep.subr.mxu0 %v228
    %260 = vmatpush1.xpose.msra.mxu0 %v227
    %261 = vmatprep.subr.mxu0 0.0
    %262 = vmatpush1.xpose.msra.mxu0 0.0
    %263 = vmatprep.subr.mxu0 0.0
    %264 = vmatpush1.xpose.msra.mxu0 0.0
    %265 = vmatprep.subr.mxu0 0.0
    %266 = vmatpush1.xpose.msra.mxu0 0.0
    %267 = vmatprep.subr.mxu0 0.0
    %268 = vmatpush1.xpose.msra.mxu0 0.0
    %269 = vmatprep.subr.mxu0 0.0
    %270 = vmatpush1.xpose.msra.mxu0 0.0
    %271 = vmatprep.subr.mxu0 0.0
    %272 = vmatpush1.xpose.msra.mxu0 0.0
    %273 = vmatprep.subr.mxu0 0.0
    %274 = vmatpush1.xpose.msra.mxu0 0.0
    %275 = vmatprep.subr.mxu0 0.0
    %276 = vmatpush1.xpose.msra.mxu0 0.0
    %277 = vmatprep.subr.mxu0 0.0
    %278 = vmatpush1.xpose.msra.mxu0 0.0
    %279 = vmatprep.subr.mxu0 0.0
    %280 = vmatpush1.xpose.msra.mxu0 0.0
    %281 = vmatprep.subr.mxu0 0.0
    %282 = vmatpush1.xpose.msra.mxu0 0.0
    %283 = vmatprep.subr.mxu0 0.0
    %284 = vmatpush1.xpose.msra.mxu0 0.0
    %285 = vmatprep.subr.mxu0 0.0
    %286 = vmatpush1.xpose.msra.mxu0 0.0
    %287 = vmatprep.subr.mxu0 0.0
    %288 = vmatpush1.xpose.msra.mxu0 0.0
    %289 = vmatprep.subr.mxu0 0.0
    %290 = vmatpush1.xpose.msra.mxu0 0.0
    %291 = vmatprep.subr.mxu0 0.0
    %292 = vmatpush1.xpose.msra.mxu0 0.0
    %293 = vmatprep.mubr.f32.mxu0 %v84
    %294 = vmatmul.mubr.f32.gmra.mrb[0].mxu0 %v83
    %v295 = vpop.f32.mrb[0].mxu0
    %v296 = vadd.f32 0.0, %v295
    %v297 = vpop.f32.mrb[0].mxu0
    %298 = vdwg.mxu0
    %v299 = vmul.f32 %v296, %v296
    %v300 = vsub.f32 1.0, %v299
    %v301 = vmax.f32 %v300, 0.0
    %v302 = vrsqrt.pop %v301
    %v303 = vmul.f32 %v301, %v302
    %vm304 = vcmp.eq.f32.partialorder %v301, inf
    %v305 = vsel %vm304, %v301, %v303
    %vm306 = vcmp.eq.f32.partialorder %v301, 0.0
    %v307 = vand.u32 %v301, 2147483648
    %v308 = vsel %vm306, %v307, %v305
    %v309 = vmul.f32 %v296, 0.87758255
    %v310 = vmul.f32 %v308, 0.47942555
    %v311 = vsub.f32 %v309, %v310
    %vm312 = vcmp.gt.f32.partialorder %v296, -0.87758255
    %v313 = vsub.f32 %v296, 0.23971277
    %v314 = vsel %vm312, %v311, %v313
    %s315 = smul.u32 0, 128
    %v316 = vlaneseq
    %v317 = vand.u32 %v316, 127
    %v318 = vstv %s315
    %v319 = vadd.s32 %v318, %v317
    %320 = vset.pattern.permute.xlu0 0
    %321 = vperm.xlu0 %320, %v75
    %v322 = vpop.permute.xlu0 %321
    %vm323 = vcmp.eq.s32.totalorder %v319, %v322
    %v324 = vsel %vm323, %v314, %v296
    %v325 = vmul.f32 %v324, 64.0
    %326 = vst [vmem:[#allocation7] sm:$0xff] %v325
    // Predicated region
    $region22: #{tpu_custom_call.1} parent=1 // pred_check
      _
    $region23: #{tpu_custom_call.1} parent=1 // pred_check_branch
      %328 = sbr.rel (0) target = $region25
    $region24: #{tpu_custom_call.1} parent=1 // pred_region
      %s330 = ssub.s32 128, 128
      %331 = vsyncadd [#allocation4], %s330
      %s333 = sshll.u32 [#allocation7], 4
      %s334 = int_to_ptr.vmem [resolvable:$true] %s333
      %336 = dma.vmem_to_hbm [thread:$0]  %s334, 128, %s3, [#allocation4]
    $region25: #{tpu_custom_call.1} parent=1 // pred_fallthru
      _
    // Predicated region
    $region26: #{tpu_custom_call.1} parent=1 // pred_check
      _
    $region27: #{tpu_custom_call.1} parent=1 // pred_check_branch
      %338 = sbr.rel (0) target = $region29
    $region28: #{tpu_custom_call.1} parent=1 // pred_region
      %339 = dma.done [#allocation4], 128
    $region29: #{tpu_custom_call.1} parent=1 // pred_fallthru
      _
    %340 = vsyncpa [#allocation3], 1
    %341 = vsyncpa [#allocation6], 1
    %342 = vsyncpa [#allocation4], 1

</llo_original>
